<compile_context>
chip_gen: v7x
topology: tpu7x:2x2x1
jax: 0.10.0
libtpu: 0.0.40
codegen_flags: <defaults>
</compile_context>

<pallas_src>
import jax
import jax.numpy as jnp
from jax import lax
from jax.experimental import pallas as pl
from jax.experimental.pallas import tpu as pltpu


def _round_up(x, m):
    return ((x + m - 1) // m) * m


def _center_loss_kernel(feat_ref, label_ref, centers_ref, out_ref):
    """feat_ref:    VMEM (TB, Dp)  float32
       label_ref:   VMEM (TB, 1)   int32   (padded rows hold -1)
       centers_ref: VMEM (Cp, Dp)  float32 (resident across grid steps)
       out_ref:     VMEM (1, 8, 128) float32  per-tile partial sum (broadcast)
    """
    feat = feat_ref[...]                      # (TB, Dp) f32
    labels = label_ref[...]                   # (TB, 1)  i32
    centers = centers_ref[...]                # (Cp, Dp) f32

    tb = feat.shape[0]
    cp = centers.shape[0]

    # One-hot gather of centers rows on the MXU: (TB,Cp) @ (Cp,Dp) -> (TB,Dp).
    # Padded rows (label == -1) and out-of-range labels give an all-zero row,
    # so they contribute zero (also avoids any OOB VMEM read).
    class_ids = lax.broadcasted_iota(jnp.int32, (tb, cp), 1)
    onehot = (class_ids == labels).astype(jnp.float32)
    gathered = jnp.dot(onehot, centers, preferred_element_type=jnp.float32)

    diff = feat - gathered                    # VPU
    partial = jnp.sum(diff * diff)            # one tile-level reduction per step

    out_ref[...] = jnp.full(out_ref.shape, partial, dtype=out_ref.dtype)


def center_loss(label, feat, centers, *, tb_max=256):
    """Pallas wrapper. Returns scalar float32 loss (matches CenterlossFunc.forward)."""
    B, D = feat.shape
    C, Dc = centers.shape
    assert D == Dc, "Center's dim should be equal to input feature's dim"

    # Lane-dense padding (last dim -> multiple of 128).
    Dp = _round_up(D, 128)
    Cp = _round_up(C, 128)

    # Batch tile: multiple of 8 sublanes, up to tb_max rows.
    TB = tb_max if B >= tb_max else _round_up(B, 8)
    Bp = _round_up(B, TB)
    num_tiles = Bp // TB

    # Zero-pad features/centers; pad labels with -1 so padded rows vanish.
    feat_p = jnp.zeros((Bp, Dp), jnp.float32).at[:B, :D].set(feat.astype(jnp.float32))
    centers_p = jnp.zeros((Cp, Dp), jnp.float32).at[:C, :D].set(centers.astype(jnp.float32))
    label_p = jnp.full((Bp, 1), -1, jnp.int32).at[:B, 0].set(label.astype(jnp.int32))

    # VMEM budget: double-buffered feat/label tiles + resident centers + output.
    vmem_bytes = (2 * TB * Dp * 4          # feat tile (double-buffered)
                  + 2 * TB * 128 * 4       # label tile (lane-padded layout)
                  + 2 * Cp * Dp * 4        # centers block
                  + 2 * 8 * 128 * 4        # output block
                  + (1 << 20))             # slack
    vmem_limit = min(max(vmem_bytes, 16 * 1024 * 1024), 64 * 1024 * 1024)

    partials = pl.pallas_call(
        _center_loss_kernel,
        out_shape=jax.ShapeDtypeStruct((num_tiles, 8, 128), jnp.float32),
        grid_spec=pltpu.PrefetchScalarGridSpec(
            num_scalar_prefetch=0,
            grid=(num_tiles,),
            in_specs=[
                pl.BlockSpec((TB, Dp), lambda b: (b, 0)),     # feat tile
                pl.BlockSpec((TB, 1), lambda b: (b, 0)),      # label tile
                pl.BlockSpec((Cp, Dp), lambda b: (0, 0)),     # centers (resident)
            ],
            out_specs=pl.BlockSpec((1, 8, 128), lambda b: (b, 0, 0)),
        ),
        compiler_params=pltpu.CompilerParams(
            dimension_semantics=("parallel",),                # megacore-friendly
            vmem_limit_bytes=vmem_limit,
        ),
    )(feat_p, label_p, centers_p)

    # Each tile's block is a broadcast of its scalar partial; take lane 0.
    return 0.5 * jnp.sum(partials[:, 0, 0])


class CenterLossPallas:
    """Mirrors the nn.Module: holds `centers` parameter, forward(label, feat)."""

    def __init__(self, num_classes, feat_dim, key):
        # deterministic synthetic parameter init (torch.randn analogue)
        self.centers = jax.random.normal(key, (num_classes, feat_dim), dtype=jnp.float32)
        self.feat_dim = feat_dim

    def __call__(self, label, feat):
        batch_size = feat.shape[0]
        # Robust version of torch's view(B,1,1,-1).squeeze() (does not drop the
        # batch dim when batch_size == 1).
        feat = feat.reshape(batch_size, -1)
        if feat.shape[1] != self.feat_dim:
            raise ValueError(
                "Center's dim: {0} should be equal to input feature's dim: {1}".format(
                    self.feat_dim, feat.shape[1]))
        return center_loss(label, feat, self.centers)


if __name__ == "__main__":
    key = jax.random.PRNGKey(0)
    k_centers, k_feat, k_label = jax.random.split(key, 3)

    num_classes = 10
    feat_dim = 32
    batch = 8

    module = CenterLossPallas(num_classes, feat_dim, k_centers)

    feat = jax.random.normal(k_feat, (batch, feat_dim), dtype=jnp.float32)
    label = jax.random.randint(k_label, (batch,), 0, num_classes, dtype=jnp.int32)

    loss = module(label, feat)
    loss = jax.block_until_ready(loss)

    # pure-JAX reference check
    ref = 0.5 * jnp.sum((feat - module.centers[label]) ** 2)
    assert jnp.allclose(loss, ref, rtol=1e-5, atol=1e-5), (loss, ref)

    print("KERNEL_OK")
</pallas_src>

<mosaic_0001>
module attributes {stable_mosaic.version = 11 : i64} {
  func.func @_center_loss_kernel(%arg0: i32, %arg1: memref<8x128xf32, #tpu.memory_space<vmem>>, %arg2: memref<8x1xi32, #tpu.memory_space<vmem>>, %arg3: memref<128x128xf32, #tpu.memory_space<vmem>>, %arg4: memref<1x8x128xf32, #tpu.memory_space<vmem>>) attributes {dimension_semantics = [#tpu.dimension_semantics<parallel>], iteration_bounds = array<i64: 1>, scalar_prefetch = 0 : i64, scratch_operands = 0 : i64, tpu.core_type = #tpu.core_type<tc>, window_params = [{transform_indices = @transform_0, window_bounds = array<i64: 8, 128>}, {transform_indices = @transform_1, window_bounds = array<i64: 8, 1>}, {pipeline_mode = #tpu.pipeline_mode<synchronous>, transform_indices = @transform_2, window_bounds = array<i64: 128, 128>}, {transform_indices = @transform_3, window_bounds = array<i64: 1, 8, 128>}]} {
    %c0 = arith.constant 0 : index
    %c0_0 = arith.constant 0 : index
    %0 = vector.load %arg1[%c0, %c0_0] : memref<8x128xf32, #tpu.memory_space<vmem>>, vector<8x128xf32>
    %c0_1 = arith.constant 0 : index
    %c0_2 = arith.constant 0 : index
    %1 = vector.load %arg2[%c0_1, %c0_2] : memref<8x1xi32, #tpu.memory_space<vmem>>, vector<8x1xi32>
    %c0_3 = arith.constant 0 : index
    %c0_4 = arith.constant 0 : index
    %2 = vector.load %arg3[%c0_3, %c0_4] : memref<128x128xf32, #tpu.memory_space<vmem>>, vector<128x128xf32>
    %3 = tpu.iota {dimensions = array<i32: 1>} : vector<8x128xi32>
    %4 = vector.broadcast %1 : vector<8x1xi32> to vector<8x128xi32>
    %5 = arith.cmpi eq, %3, %4 : vector<8x128xi32>
    %6 = arith.extui %5 : vector<8x128xi1> to vector<8x128xi32>
    %7 = arith.sitofp %6 : vector<8x128xi32> to vector<8x128xf32>
    %cst = arith.constant dense<0.000000e+00> : vector<8x128xf32>
    %8 = tpu.matmul %7, %2, %cst {dimension_numbers = #tpu.dot_dimension_numbers<[1], [0], [0], [1], [0, 0, 1, 1], [], []>} : vector<8x128xf32>, vector<128x128xf32>, vector<8x128xf32> -> vector<8x128xf32>
    %9 = arith.subf %0, %8 : vector<8x128xf32>
    %10 = arith.mulf %9, %9 : vector<8x128xf32>
    %11 = vector.shape_cast %10 : vector<8x128xf32> to vector<1x8x128xf32>
    %cst_5 = arith.constant dense<0.000000e+00> : vector<1xf32>
    %12 = vector.multi_reduction <add>, %11, %cst_5 [1, 2] : vector<1x8x128xf32> to vector<1xf32>
    %13 = vector.shape_cast %12 : vector<1xf32> to vector<1x1x1xf32>
    %14 = vector.extract %13[0, 0, 0] : f32 from vector<1x1x1xf32>
    %15 = vector.broadcast %14 : f32 to vector<1x8x128xf32>
    %c0_6 = arith.constant 0 : index
    %c0_7 = arith.constant 0 : index
    %c0_8 = arith.constant 0 : index
    %16 = vector.load %arg4[%c0_6, %c0_7, %c0_8] : memref<1x8x128xf32, #tpu.memory_space<vmem>>, vector<1x8x128xf32>
    tpu.vector_store %arg4[%c0_6, %c0_7, %c0_8], %15 {strides = array<i32>} : memref<1x8x128xf32, #tpu.memory_space<vmem>>, vector<1x8x128xf32>,
    return
  }
  func.func @transform_0(%arg0: i32) -> (i32, i32) {
    %c0_i32 = arith.constant 0 : i32
    %c0_i32_0 = arith.constant 0 : i32
    return %arg0, %c0_i32 : i32, i32
  }
  func.func @transform_1(%arg0: i32) -> (i32, i32) {
    %c0_i32 = arith.constant 0 : i32
    %c0_i32_0 = arith.constant 0 : i32
    return %arg0, %c0_i32 : i32, i32
  }
  func.func @transform_2(%arg0: i32) -> (i32, i32) {
    %c0_i32 = arith.constant 0 : i32
    %c0_i32_0 = arith.constant 0 : i32
    %c0_i32_1 = arith.constant 0 : i32
    return %c0_i32, %c0_i32_0 : i32, i32
  }
  func.func @transform_3(%arg0: i32) -> (i32, i32, i32) {
    %c0_i32 = arith.constant 0 : i32
    %c0_i32_0 = arith.constant 0 : i32
    %c0_i32_1 = arith.constant 0 : i32
    return %arg0, %c0_i32, %c0_i32_0 : i32, i32, i32
  }
}

</mosaic_0001>

<llo_original>
// kernel: tpu_custom_call.1
$region0: #{tpu_custom_call.1}
  #allocation0 [shape = 'u32[]', space=smem, size = 0x4, offset = 0x4, fixed_abs, tag = 'smem constant byte address 0x4 - core index']
  #allocation1 [shape = 'u32[144,128]{1,0:T(1,128)}', space=vmem, size = 0x12000, scoped, tag = 'internal scratch']
  %s0 = inlined_call_operand.vmem [shape: f32[8,128], index: 0, kind: input, shape index: {}]
  %s1 = inlined_call_operand.vmem [shape: s32[8,1], index: 1, kind: input, shape index: {}]
  %s2 = inlined_call_operand.hbm [shape: f32[128,128], index: 2, kind: input, shape index: {}]
  %s3 = inlined_call_operand.hbm [shape: f32[1,8,128], index: 3, kind: output, shape index: {}]
  %s4 = sld [smem:[#allocation0]]
  $region26: #{tpu_custom_call.1} parent=0
    _
  %s6 = ssub.s32 1, %s4
  %s7 = scalar_select 0, %s6, %s4
  $region1: #{tpu_custom_call.1} parent=0
    #allocation2 [shape = 'u8[65536]{0}', space=vmem, size = 0x10000, scoped, tag = 'input window, operand 2, single buffered']
    #allocation3 [shape = 's32[1]{0}', space=sflag, size = 0x4, scoped, tag = 'scoped memory for tpu_custom_call.1']
    #allocation4 [shape = 's32[1]{0}', space=sflag, size = 0x4, scoped, tag = 'scoped memory for tpu_custom_call.1']
    #allocation5 [shape = 'u8[4096]{0}', space=vmem, size = 0x1000, scoped, tag = 'output window, operand 0, single buffered']
    %8 = vsyncpa [#allocation3], 0
    %9 = vsyncpa [#allocation4], 0
    // Predicated region
    $region2: #{tpu_custom_call.1} parent=1 // pred_check
      _
    $region3: #{tpu_custom_call.1} parent=1 // pred_check_branch
      %11 = sbr.rel (0) target = $region5
    $region4: #{tpu_custom_call.1} parent=1 // pred_region
      _
    $region5: #{tpu_custom_call.1} parent=1 // pred_fallthru
      _
    // Predicated region
    $region6: #{tpu_custom_call.1} parent=1 // pred_check
      _
    $region7: #{tpu_custom_call.1} parent=1 // pred_check_branch
      %13 = sbr.rel (0) target = $region9
    $region8: #{tpu_custom_call.1} parent=1 // pred_region
      _
    $region9: #{tpu_custom_call.1} parent=1 // pred_fallthru
      _
    // Predicated region
    $region10: #{tpu_custom_call.1} parent=1 // pred_check
      _
    $region11: #{tpu_custom_call.1} parent=1 // pred_check_branch
      %15 = sbr.rel (0) target = $region13
    $region12: #{tpu_custom_call.1} parent=1 // pred_region
      %s17 = ssub.s32 2048, 2048
      %18 = vsyncadd [#allocation3], %s17
      %s19 = sshll.u32 [#allocation2], 4
      %s20 = int_to_ptr.vmem [resolvable:$true] %s19
      %25 = dma.hbm_to_vmem [thread:$0]  %s2, 2048, %s20, [#allocation3], 128, 128, 8
    $region13: #{tpu_custom_call.1} parent=1 // pred_fallthru
      _
    // Predicated region
    $region14: #{tpu_custom_call.1} parent=1 // pred_check
      _
    $region15: #{tpu_custom_call.1} parent=1 // pred_check_branch
      %27 = sbr.rel (0) target = $region17
    $region16: #{tpu_custom_call.1} parent=1 // pred_region
      %28 = dma.done [#allocation3], 2048
    $region17: #{tpu_custom_call.1} parent=1 // pred_fallthru
      _
    %v29 = vld [vmem:[%s0] sm:$0xff]
    %v30 = vld [vmem:[%s1] sm:$0xff]
    %v31 = vld [vmem:[#allocation2] sm:$0xff]
    %v32 = vld [vmem:[#allocation2 + $0x8] sm:$0xff]
    %v33 = vld [vmem:[#allocation2 + $0x10] sm:$0xff]
    %v34 = vld [vmem:[#allocation2 + $0x18] sm:$0xff]
    %v35 = vld [vmem:[#allocation2 + $0x20] sm:$0xff]
    %v36 = vld [vmem:[#allocation2 + $0x28] sm:$0xff]
    %v37 = vld [vmem:[#allocation2 + $0x30] sm:$0xff]
    %v38 = vld [vmem:[#allocation2 + $0x38] sm:$0xff]
    %v39 = vld [vmem:[#allocation2 + $0x40] sm:$0xff]
    %v40 = vld [vmem:[#allocation2 + $0x48] sm:$0xff]
    %v41 = vld [vmem:[#allocation2 + $0x50] sm:$0xff]
    %v42 = vld [vmem:[#allocation2 + $0x58] sm:$0xff]
    %v43 = vld [vmem:[#allocation2 + $0x60] sm:$0xff]
    %v44 = vld [vmem:[#allocation2 + $0x68] sm:$0xff]
    %v45 = vld [vmem:[#allocation2 + $0x70] sm:$0xff]
    %v46 = vld [vmem:[#allocation2 + $0x78] sm:$0xff]
    %v47 = vlaneseq
    %v48 = vand.u32 %v47, 127
    %49 = vset.pattern.permute.xlu0 0
    %50 = vperm.xlu0 %49, %v30
    %v51 = vpop.permute.xlu0 %50
    %vm52 = vcmp.eq.s32.totalorder %v48, %v51
    %v53 = vsel %vm52, 1, 0
    %v54 = vcvt.s32.f32 %v53
    %55 = vmatprep.subr.mxu0 0.0
    %56 = vmatpush1.msra.mxu0 %v31
    %57 = vmatprep.subr.mxu0 0.0
    %58 = vmatpush1.msra.mxu0 %v32
    %59 = vmatprep.subr.mxu0 0.0
    %60 = vmatpush1.msra.mxu0 %v33
    %61 = vmatprep.subr.mxu0 0.0
    %62 = vmatpush1.msra.mxu0 %v34
    %63 = vmatprep.subr.mxu0 0.0
    %64 = vmatpush1.msra.mxu0 %v35
    %65 = vmatprep.subr.mxu0 0.0
    %66 = vmatpush1.msra.mxu0 %v36
    %67 = vmatprep.subr.mxu0 0.0
    %68 = vmatpush1.msra.mxu0 %v37
    %69 = vmatprep.subr.mxu0 0.0
    %70 = vmatpush1.msra.mxu0 %v38
    %71 = vmatprep.subr.mxu0 0.0
    %72 = vmatpush1.msra.mxu0 %v39
    %73 = vmatprep.subr.mxu0 0.0
    %74 = vmatpush1.msra.mxu0 %v40
    %75 = vmatprep.subr.mxu0 0.0
    %76 = vmatpush1.msra.mxu0 %v41
    %77 = vmatprep.subr.mxu0 0.0
    %78 = vmatpush1.msra.mxu0 %v42
    %79 = vmatprep.subr.mxu0 0.0
    %80 = vmatpush1.msra.mxu0 %v43
    %81 = vmatprep.subr.mxu0 0.0
    %82 = vmatpush1.msra.mxu0 %v44
    %83 = vmatprep.subr.mxu0 0.0
    %84 = vmatpush1.msra.mxu0 %v45
    %85 = vmatprep.subr.mxu0 0.0
    %86 = vmatpush1.msra.mxu0 %v46
    %87 = vmatprep.subr.mxu0 0.0
    %88 = vmatpush1.msra.mxu0 0.0
    %89 = vmatprep.subr.mxu0 0.0
    %90 = vmatpush1.msra.mxu0 0.0
    %91 = vmatprep.subr.mxu0 0.0
    %92 = vmatpush1.msra.mxu0 0.0
    %93 = vmatprep.subr.mxu0 0.0
    %94 = vmatpush1.msra.mxu0 0.0
    %95 = vmatprep.subr.mxu0 0.0
    %96 = vmatpush1.msra.mxu0 0.0
    %97 = vmatprep.subr.mxu0 0.0
    %98 = vmatpush1.msra.mxu0 0.0
    %99 = vmatprep.subr.mxu0 0.0
    %100 = vmatpush1.msra.mxu0 0.0
    %101 = vmatprep.subr.mxu0 0.0
    %102 = vmatpush1.msra.mxu0 0.0
    %103 = vmatprep.subr.mxu0 0.0
    %104 = vmatpush1.msra.mxu0 0.0
    %105 = vmatprep.subr.mxu0 0.0
    %106 = vmatpush1.msra.mxu0 0.0
    %107 = vmatprep.subr.mxu0 0.0
    %108 = vmatpush1.msra.mxu0 0.0
    %109 = vmatprep.subr.mxu0 0.0
    %110 = vmatpush1.msra.mxu0 0.0
    %111 = vmatprep.subr.mxu0 0.0
    %112 = vmatpush1.msra.mxu0 0.0
    %113 = vmatprep.subr.mxu0 0.0
    %114 = vmatpush1.msra.mxu0 0.0
    %115 = vmatprep.subr.mxu0 0.0
    %116 = vmatpush1.msra.mxu0 0.0
    %117 = vmatprep.subr.mxu0 0.0
    %118 = vmatpush1.msra.mxu0 0.0
    %119 = vmatprep.mubr.f32.mxu0 0.0
    %120 = vmatmul.mubr.f32.gmra.mrb[0].mxu0 %v54
    %v121 = vpop.f32.mrb[0].mxu0
    %v122 = vadd.f32 0.0, %v121
    %v123 = vpop.f32.mrb[0].mxu0
    %124 = vdwg.mxu0
    %v125 = vsub.f32 %v29, %v122
    %v126 = vmul.f32 %v125, %v125
    %127 = vadd.xlane.f32.xlu0 %v126
    %v128 = vpop.xlane.xlu0 %127
    %v129 = vrot.slane %v128, 4
    %v130 = vadd.f32 %v128, %v129
    %v131 = vrot.slane %v130, 2
    %v132 = vadd.f32 %v130, %v131
    %v133 = vrot.slane %v132, 1
    %v134 = vadd.f32 %v132, %v133
    %s135 = vtos %v134
    %v136 = vstv %s135
    %137 = vst [vmem:[#allocation5] sm:$0xff] %v136
    // Predicated region
    $region18: #{tpu_custom_call.1} parent=1 // pred_check
      _
    $region19: #{tpu_custom_call.1} parent=1 // pred_check_branch
      %139 = sbr.rel (0) target = $region21
    $region20: #{tpu_custom_call.1} parent=1 // pred_region
      %s141 = ssub.s32 128, 128
      %142 = vsyncadd [#allocation4], %s141
      %s144 = sshll.u32 [#allocation5], 4
      %s145 = int_to_ptr.vmem [resolvable:$true] %s144
      %147 = dma.vmem_to_hbm [thread:$0]  %s145, 128, %s3, [#allocation4]
    $region21: #{tpu_custom_call.1} parent=1 // pred_fallthru
      _
    // Predicated region
    $region22: #{tpu_custom_call.1} parent=1 // pred_check
      _
    $region23: #{tpu_custom_call.1} parent=1 // pred_check_branch
      %149 = sbr.rel (0) target = $region25
    $region24: #{tpu_custom_call.1} parent=1 // pred_region
      %150 = dma.done [#allocation4], 128
    $region25: #{tpu_custom_call.1} parent=1 // pred_fallthru
      _
    %151 = vsyncpa [#allocation3], 1
    %152 = vsyncpa [#allocation4], 1

</llo_original>
